<compile_context>
chip_gen: v7x
topology: tpu7x:2x2x1
jax: 0.10.0
libtpu: 0.0.40
codegen_flags: <defaults>
</compile_context>

<pallas_src>
import functools

import jax
import jax.numpy as jnp
import numpy as np
from jax.experimental import pallas as pl
from jax.experimental.pallas import tpu as pltpu

WIN = 9               # default window [9, 9] from the module (ndims == 2)
PAD = WIN // 2
EPS = 1e-5


def _band(n, pad):
    """(n, n) ones band matrix: band[i, j] = 1 iff |i - j| <= pad."""
    idx = np.arange(n)
    return (np.abs(idx[:, None] - idx[None, :]) <= pad).astype(np.float32)


def _band_blockdiag(copies, block, pad):
    """Block-diagonal of `copies` copies of _band(block, pad).

    Used for A (per-image row windows: padding clipped per image, no leakage
    across images) and for the fused column pass (five independent W-bands)."""
    n = copies * block
    idx = np.arange(n)
    same_blk = (idx[:, None] // block) == (idx[None, :] // block)
    band = np.abs(idx[:, None] - idx[None, :]) <= pad
    return (same_blk & band).astype(np.float32)


def _tpu_params():
    """(mxu_contraction_tile, physical_vmem_bytes) with safe fallbacks."""
    mxu_tile = 256                      # v6e / v7x native MXU tile
    vmem_bytes = 64 * 1024 * 1024       # v7x per-TC VMEM (most restrictive)
    try:
        kind = jax.devices()[0].device_kind.lower()
        if "v5 lite" in kind or "v5e" in kind or "v5litepod" in kind:
            mxu_tile = 128              # v5e MXU is 128x128
    except Exception:
        pass
    try:
        vmem_bytes = int(pltpu.get_tpu_info().vmem_capacity_bytes)
    except Exception:
        pass
    return mxu_tile, vmem_bytes


def _choose_nb(n, h, w, mxu_tile, budget):
    """Images per grid step.

    * nb*H capped at one MXU contraction tile (row-pass FLOPs of the
      block-diagonal A grow quadratically in nb*H, useful work only linearly).
    * prefer grid length >= 2 so both v7x TensorCores get work.
    * (8,128): when G > 1 the tile's sublane extent nb*H must be a multiple
      of 8 (full-array blocks, i.e. G == 1, are exempt).
    * bounded VMEM working set (double-buffered I/J tiles + resident A/B +
      live f32 intermediates).
    """
    b_side = 5 * w if 5 * w <= 128 else w

    def fits(nb):
        nbh = nb * h
        a_bytes = 2 * nbh * nbh * 4            # A, double-buffered by default
        b_bytes = 2 * b_side * b_side * 4
        io_bytes = 2 * 2 * nbh * w * 4         # I, J tiles, double-buffered
        inter = 10 * nbh * 5 * w * 4           # live f32 intermediates
        return a_bytes + b_bytes + io_bytes + inter <= budget

    def aligned(nb):
        return (nb * h) % 8 == 0 or nb >= n    # G == 1 -> full-dim block exempt

    cands = [nb for nb in range(1, n + 1)
             if (nb * h <= mxu_tile or nb == 1) and fits(nb) and aligned(nb)]
    if not cands:
        # TODO(synk): spatial tiling over H for very large images.
        return 1
    multi = [nb for nb in cands if nb < n]     # nb < n  <=>  G >= 2
    return max(multi) if multi else max(cands)


def _lcc_kernel(a_ref, b_ref, i_ref, j_ref, out_ref, *,
                W, fused_cols, inv_win, eps):
    A = a_ref[...]                      # (nb*H, nb*H) block-diag band of ones
    Bm = b_ref[...]                     # (5W, 5W) block-diag band, or (W, W)
    X = i_ref[...]                      # (nb*H, W) — batch folded into sublanes
    Y = j_ref[...]

    # All five statistics share the same 9x9 box filter; run the row pass as a
    # single MXU matmul over the lane-concatenated statistics (A pushed through
    # the MXU once, lane-dense for small W).
    M = jnp.concatenate([X, Y, X * X, Y * Y, X * Y], axis=1)       # (nb*H, 5W)
    rows = jnp.dot(A, M, preferred_element_type=jnp.float32)       # (nb*H, 5W)

    if fused_cols:
        # 5W <= 128: one column-pass matmul against a block-diag of 5 W-bands.
        S = jnp.dot(rows, Bm, preferred_element_type=jnp.float32)  # (nb*H, 5W)
        stats = [S[:, k * W:(k + 1) * W] for k in range(5)]
    else:
        stats = [jnp.dot(rows[:, k * W:(k + 1) * W], Bm,
                         preferred_element_type=jnp.float32) for k in range(5)]

    I_sum, J_sum, I2_sum, J2_sum, IJ_sum = stats

    # Algebraically identical to the PyTorch expressions with win_size == 81.
    cross = IJ_sum - I_sum * J_sum * inv_win
    # Exact math keeps the variances >= 0; clamp to guard against f32
    # cancellation making the denominator negative.
    I_var = jnp.maximum(I2_sum - I_sum * I_sum * inv_win, 0.0)
    J_var = jnp.maximum(J2_sum - J_sum * J_sum * inv_win, 0.0)

    cc = (cross * cross) * pl.reciprocal(I_var * J_var + eps, approx=False)

    # Lane-dense per-step partial sum; reduced in the wrapper.
    out_ref[...] = jnp.broadcast_to(jnp.sum(cc), out_ref.shape)


def lcc_loss(I, J, eps=EPS):
    """LCC loss: -mean(cc) + 1.  I, J: (N, 1, H, W) (NCHW), C == 1."""
    N, C, H, W = I.shape
    assert C == 1, "LCC conv filter is [1,1,9,9]; only C==1 is supported"

    mxu_tile, vmem_bytes = _tpu_params()
    vmem_limit = min(vmem_bytes // 2, 64 * 1024 * 1024)   # 64 MiB on v5e/v6e, 32 MiB on v7x
    budget = (3 * vmem_limit) // 4

    nb = _choose_nb(N, H, W, mxu_tile, budget)
    G = -(-N // nb)                       # ceil(N / nb)
    Np = G * nb

    Ix = I[:, 0].astype(jnp.float32)      # (N, H, W), no spatial padding
    Jx = J[:, 0].astype(jnp.float32)
    if Np != N:
        # Zero images contribute exactly 0 to sum(cc) (cross == 0, cc == 0).
        Ix = jnp.pad(Ix, ((0, Np - N), (0, 0), (0, 0)))
        Jx = jnp.pad(Jx, ((0, Np - N), (0, 0), (0, 0)))
    # Flatten batch into the sublane axis in the wrapper (free relayout on HBM)
    # so the kernel sees a plain 2-D slab and never reshapes in VMEM.
    Ix = Ix.reshape(Np * H, W)
    Jx = Jx.reshape(Np * H, W)

    fused_cols = 5 * W <= 128
    A = jnp.asarray(_band_blockdiag(nb, H, PAD))                    # (nb*H, nb*H)
    Bm = jnp.asarray(_band_blockdiag(5, W, PAD) if fused_cols else _band(W, PAD))

    partials = pl.pallas_call(
        functools.partial(_lcc_kernel, W=W, fused_cols=fused_cols,
                          inv_win=1.0 / float(WIN * WIN), eps=float(eps)),
        out_shape=jax.ShapeDtypeStruct((G, 8, 128), jnp.float32),
        grid=(G,),
        in_specs=[
            pl.BlockSpec((nb * H, nb * H), lambda g: (0, 0)),   # A (resident)
            pl.BlockSpec(Bm.shape, lambda g: (0, 0)),           # B (resident)
            pl.BlockSpec((nb * H, W), lambda g: (g, 0)),        # I tile
            pl.BlockSpec((nb * H, W), lambda g: (g, 0)),        # J tile
        ],
        out_specs=pl.BlockSpec((1, 8, 128), lambda g: (g, 0, 0)),
        compiler_params=pltpu.CompilerParams(
            dimension_semantics=("parallel",),
            vmem_limit_bytes=int(vmem_limit),
        ),
    )(A, Bm, Ix, Jx)

    total = jnp.sum(partials[:, 0, 0])
    return -(total / float(N * H * W)) + 1.0


def _lcc_reference(I, J, eps=EPS):
    """Pure-JAX reference (mirrors the PyTorch forward, in float32)."""
    N, C, H, W = I.shape
    filt = jnp.ones((1, 1, WIN, WIN), jnp.float32)
    win_size = float(WIN * WIN)

    def conv(x):
        return jax.lax.conv_general_dilated(
            x.astype(jnp.float32), filt, window_strides=(1, 1),
            padding=((PAD, PAD), (PAD, PAD)),
            dimension_numbers=("NCHW", "OIHW", "NCHW"))

    I = I.astype(jnp.float32)
    J = J.astype(jnp.float32)
    I_sum = conv(I)
    J_sum = conv(J)
    I2_sum = conv(I * I)
    J2_sum = conv(J * J)
    IJ_sum = conv(I * J)
    u_I = I_sum / win_size
    u_J = J_sum / win_size
    cross = IJ_sum - u_J * I_sum - u_I * J_sum + u_I * u_J * win_size
    I_var = I2_sum - 2 * u_I * I_sum + u_I * u_I * win_size
    J_var = J2_sum - 2 * u_J * J_sum + u_J * u_J * win_size
    cc = cross * cross / (I_var * J_var + eps)
    return -jnp.mean(cc) + 1.0


if __name__ == "__main__":
    key = jax.random.PRNGKey(0)
    k1, k2 = jax.random.split(key)
    N, C, H, W = 2, 1, 16, 16
    I = jax.random.uniform(k1, (N, C, H, W), dtype=jnp.float32)
    J = jax.random.uniform(k2, (N, C, H, W), dtype=jnp.float32)

    loss = jax.block_until_ready(lcc_loss(I, J))
    ref = jax.block_until_ready(_lcc_reference(I, J))

    np.testing.assert_allclose(np.asarray(loss), np.asarray(ref),
                               rtol=1e-4, atol=1e-4)
    print("KERNEL_OK")
</pallas_src>

<mosaic_0001>
module attributes {stable_mosaic.version = 11 : i64} {
  func.func @_lcc_kernel(%arg0: i32, %arg1: memref<16x16xf32, #tpu.memory_space<vmem>>, %arg2: memref<80x80xf32, #tpu.memory_space<vmem>>, %arg3: memref<16x16xf32, #tpu.memory_space<vmem>>, %arg4: memref<16x16xf32, #tpu.memory_space<vmem>>, %arg5: memref<1x8x128xf32, #tpu.memory_space<vmem>>) attributes {dimension_semantics = [#tpu.dimension_semantics<parallel>], iteration_bounds = array<i64: 2>, scalar_prefetch = 0 : i64, scratch_operands = 0 : i64, tpu.core_type = #tpu.core_type<tc>, window_params = [{pipeline_mode = #tpu.pipeline_mode<synchronous>, transform_indices = @transform_0, window_bounds = array<i64: 16, 16>}, {pipeline_mode = #tpu.pipeline_mode<synchronous>, transform_indices = @transform_1, window_bounds = array<i64: 80, 80>}, {transform_indices = @transform_2, window_bounds = array<i64: 16, 16>}, {transform_indices = @transform_3, window_bounds = array<i64: 16, 16>}, {transform_indices = @transform_4, window_bounds = array<i64: 1, 8, 128>}]} {
    %c0 = arith.constant 0 : index
    %c0_0 = arith.constant 0 : index
    %0 = vector.load %arg1[%c0, %c0_0] : memref<16x16xf32, #tpu.memory_space<vmem>>, vector<16x16xf32>
    %c0_1 = arith.constant 0 : index
    %c0_2 = arith.constant 0 : index
    %1 = vector.load %arg2[%c0_1, %c0_2] : memref<80x80xf32, #tpu.memory_space<vmem>>, vector<80x80xf32>
    %c0_3 = arith.constant 0 : index
    %c0_4 = arith.constant 0 : index
    %2 = vector.load %arg3[%c0_3, %c0_4] : memref<16x16xf32, #tpu.memory_space<vmem>>, vector<16x16xf32>
    %c0_5 = arith.constant 0 : index
    %c0_6 = arith.constant 0 : index
    %3 = vector.load %arg4[%c0_5, %c0_6] : memref<16x16xf32, #tpu.memory_space<vmem>>, vector<16x16xf32>
    %4 = arith.mulf %2, %2 : vector<16x16xf32>
    %5 = arith.mulf %3, %3 : vector<16x16xf32>
    %6 = arith.mulf %2, %3 : vector<16x16xf32>
    %7 = tpu.concatenate %2, %3, %4, %5, %6 in 1 : vector<16x16xf32>, vector<16x16xf32>, vector<16x16xf32>, vector<16x16xf32>, vector<16x16xf32> -> vector<16x80xf32>
    %cst = arith.constant dense<0.000000e+00> : vector<16x80xf32>
    %8 = tpu.matmul %0, %7, %cst {dimension_numbers = #tpu.dot_dimension_numbers<[1], [0], [0], [1], [0, 0, 1, 1], [], []>} : vector<16x16xf32>, vector<16x80xf32>, vector<16x80xf32> -> vector<16x80xf32>
    %cst_7 = arith.constant dense<0.000000e+00> : vector<16x80xf32>
    %9 = tpu.matmul %8, %1, %cst_7 {dimension_numbers = #tpu.dot_dimension_numbers<[1], [0], [0], [1], [0, 0, 1, 1], [], []>} : vector<16x80xf32>, vector<80x80xf32>, vector<16x80xf32> -> vector<16x80xf32>
    %10 = vector.extract_strided_slice %9 {offsets = [0, 0], sizes = [16, 16], strides = [1, 1]} : vector<16x80xf32> to vector<16x16xf32>
    %11 = vector.extract_strided_slice %9 {offsets = [0, 16], sizes = [16, 16], strides = [1, 1]} : vector<16x80xf32> to vector<16x16xf32>
    %12 = vector.extract_strided_slice %9 {offsets = [0, 32], sizes = [16, 16], strides = [1, 1]} : vector<16x80xf32> to vector<16x16xf32>
    %13 = vector.extract_strided_slice %9 {offsets = [0, 48], sizes = [16, 16], strides = [1, 1]} : vector<16x80xf32> to vector<16x16xf32>
    %14 = vector.extract_strided_slice %9 {offsets = [0, 64], sizes = [16, 16], strides = [1, 1]} : vector<16x80xf32> to vector<16x16xf32>
    %15 = arith.mulf %10, %11 : vector<16x16xf32>
    %cst_8 = arith.constant 0.0123456791 : f32
    %16 = vector.broadcast %cst_8 : f32 to vector<16x16xf32>
    %17 = arith.mulf %15, %16 : vector<16x16xf32>
    %18 = arith.subf %14, %17 : vector<16x16xf32>
    %19 = arith.mulf %10, %10 : vector<16x16xf32>
    %cst_9 = arith.constant 0.0123456791 : f32
    %20 = vector.broadcast %cst_9 : f32 to vector<16x16xf32>
    %21 = arith.mulf %19, %20 : vector<16x16xf32>
    %22 = arith.subf %12, %21 : vector<16x16xf32>
    %cst_10 = arith.constant 0.000000e+00 : f32
    %23 = vector.broadcast %cst_10 : f32 to vector<16x16xf32>
    %24 = arith.maximumf %22, %23 : vector<16x16xf32>
    %25 = arith.mulf %11, %11 : vector<16x16xf32>
    %cst_11 = arith.constant 0.0123456791 : f32
    %26 = vector.broadcast %cst_11 : f32 to vector<16x16xf32>
    %27 = arith.mulf %25, %26 : vector<16x16xf32>
    %28 = arith.subf %13, %27 : vector<16x16xf32>
    %cst_12 = arith.constant 0.000000e+00 : f32
    %29 = vector.broadcast %cst_12 : f32 to vector<16x16xf32>
    %30 = arith.maximumf %28, %29 : vector<16x16xf32>
    %31 = arith.mulf %18, %18 : vector<16x16xf32>
    %32 = arith.mulf %24, %30 : vector<16x16xf32>
    %cst_13 = arith.constant 9.99999974E-6 : f32
    %33 = vector.broadcast %cst_13 : f32 to vector<16x16xf32>
    %34 = arith.addf %32, %33 : vector<16x16xf32>
    %35 = tpu.reciprocal %34 : vector<16x16xf32> -> vector<16x16xf32>
    %36 = arith.mulf %31, %35 : vector<16x16xf32>
    %37 = vector.shape_cast %36 : vector<16x16xf32> to vector<1x16x16xf32>
    %cst_14 = arith.constant dense<0.000000e+00> : vector<1xf32>
    %38 = vector.multi_reduction <add>, %37, %cst_14 [1, 2] : vector<1x16x16xf32> to vector<1xf32>
    %39 = vector.shape_cast %38 : vector<1xf32> to vector<1x1x1xf32>
    %40 = vector.extract %39[0, 0, 0] : f32 from vector<1x1x1xf32>
    %41 = vector.broadcast %40 : f32 to vector<1x8x128xf32>
    %c0_15 = arith.constant 0 : index
    %c0_16 = arith.constant 0 : index
    %c0_17 = arith.constant 0 : index
    %42 = vector.load %arg5[%c0_15, %c0_16, %c0_17] : memref<1x8x128xf32, #tpu.memory_space<vmem>>, vector<1x8x128xf32>
    tpu.vector_store %arg5[%c0_15, %c0_16, %c0_17], %41 {strides = array<i32>} : memref<1x8x128xf32, #tpu.memory_space<vmem>>, vector<1x8x128xf32>,
    return
  }
  func.func @transform_0(%arg0: i32) -> (i32, i32) {
    %c0_i32 = arith.constant 0 : i32
    %c0_i32_0 = arith.constant 0 : i32
    %c0_i32_1 = arith.constant 0 : i32
    return %c0_i32, %c0_i32_0 : i32, i32
  }
  func.func @transform_1(%arg0: i32) -> (i32, i32) {
    %c0_i32 = arith.constant 0 : i32
    %c0_i32_0 = arith.constant 0 : i32
    %c0_i32_1 = arith.constant 0 : i32
    return %c0_i32, %c0_i32_0 : i32, i32
  }
  func.func @transform_2(%arg0: i32) -> (i32, i32) {
    %c0_i32 = arith.constant 0 : i32
    %c0_i32_0 = arith.constant 0 : i32
    return %arg0, %c0_i32 : i32, i32
  }
  func.func @transform_3(%arg0: i32) -> (i32, i32) {
    %c0_i32 = arith.constant 0 : i32
    %c0_i32_0 = arith.constant 0 : i32
    return %arg0, %c0_i32 : i32, i32
  }
  func.func @transform_4(%arg0: i32) -> (i32, i32, i32) {
    %c0_i32 = arith.constant 0 : i32
    %c0_i32_0 = arith.constant 0 : i32
    %c0_i32_1 = arith.constant 0 : i32
    return %arg0, %c0_i32, %c0_i32_0 : i32, i32, i32
  }
}

</mosaic_0001>

<llo_original>
// kernel: tpu_custom_call.1
$region0: #{tpu_custom_call.1}
  #allocation0 [shape = 'u32[]', space=smem, size = 0x4, offset = 0x4, fixed_abs, tag = 'smem constant byte address 0x4 - core index']
  #allocation1 [shape = 'u32[144,128]{1,0:T(1,128)}', space=vmem, size = 0x12000, scoped, tag = 'internal scratch']
  %s0 = inlined_call_operand.hbm [shape: f32[16,16], index: 0, kind: input, shape index: {}]
  %s1 = inlined_call_operand.vmem [shape: f32[80,80], index: 1, kind: input, shape index: {}]
  %s2 = inlined_call_operand.vmem [shape: f32[32,16], index: 2, kind: input, shape index: {}]
  %s3 = inlined_call_operand.vmem [shape: f32[32,16], index: 3, kind: input, shape index: {}]
  %s4 = inlined_call_operand.hbm [shape: f32[2,8,128], index: 4, kind: output, shape index: {}]
  %s5 = sld [smem:[#allocation0]]
  $region53: #{tpu_custom_call.1} parent=0
    _
  %s7 = ssub.s32 1, %s5
  %s8 = scalar_select 0, %s7, %s5
  $region1: #{tpu_custom_call.1} parent=0
    #allocation2 [shape = 'u8[8192]{0}', space=vmem, size = 0x2000, scoped, tag = 'input window, operand 0, single buffered']
    #allocation3 [shape = 's32[2]{0}', space=sflag, size = 0x8, scoped, tag = 'scoped memory for tpu_custom_call.1']
    #allocation4 [shape = 's32[2]{0}', space=sflag, size = 0x8, scoped, tag = 'scoped memory for tpu_custom_call.1']
    #allocation5 [shape = 'u8[8192]{0}', space=vmem, size = 0x2000, scoped, tag = 'output window, operand 0']
    %9 = vsyncpa [#allocation3], 0
    %10 = vsyncpa [#allocation4], 0
    %s11 = scalar_lea.sflag [#allocation4], 1
    %12 = vsyncpa %s11, 0
    loop: start=0, step=1, limit=4
    $region2: #{tpu_custom_call.1} parent=1 // loop_pre_header
      _
    $region3: #{tpu_custom_call.1} parent=1 // loop_header
      %s14 = sphi 0, %s18
      %p15 = scmp.ge.s32.totalorder %s14, 4
      %s22 = sphi 0, %s22
      %s24 = sphi 0, %s22
      %s25 = sphi 0, %s24
      %s39 = sphi 0, %s25
      %s43 = sphi 0, %s43
      %s45 = sphi 0, %s43
      %s46 = sphi 0, %s45
      %s60 = sphi 0, %s46
      %s66 = sphi 0, %s68
      %s69 = sphi 0, %s66
      %s70 = sphi 0, %s69
      %s86 = sphi 0, %s70
      %s92 = sphi 0, %s94
      %s95 = sphi 0, %s92
      %s96 = sphi 0, %s95
      %s112 = sphi 0, %s96
      %s118 = sphi 0, %s120
      %s121 = sphi 0, %s118
      %s122 = sphi 0, %s121
      %s138 = sphi 0, %s122
    $region4: #{tpu_custom_call.1} parent=1 // loop_header_branch
      %17 = sbr.rel (%p15) target = $region8
    $region5: #{tpu_custom_call.1} parent=1 // loop_body
      %s19 = ssub.s32 %s14, 1
      %s20 = ssub.s32 %s14, 2
      %s21 = sadd.s32 %s14, 1
      %s23 = sadd.s32 %s22, 1
      %p26 = scmp.eq.s32.totalorder %s14, 1
      %p27 = scmp.ne.s32.totalorder %s22, %s24
      %p28 = scmp.eq.s32.totalorder %s14, 0
      %p29 = por %p27, %p28
      %p30 = scmp.ne.s32.totalorder %s22, %s24
      %p31 = scmp.eq.s32.totalorder %s19, 1
      %p32 = por %p30, %p31
      %p33 = scmp.ne.s32.totalorder %s24, %s25
      %p34 = scmp.eq.s32.totalorder %s19, 0
      %p35 = por %p33, %p34
      %p36 = scmp.ne.s32.totalorder %s24, %s25
      %p37 = scmp.eq.s32.totalorder %s20, 1
      %p38 = por %p36, %p37
      %p40 = scmp.ne.s32.totalorder %s25, %s39
      %p41 = scmp.eq.s32.totalorder %s20, 0
      %p42 = por %p40, %p41
      %s44 = sadd.s32 %s43, 1
      %p47 = scmp.eq.s32.totalorder %s14, 1
      %p48 = scmp.ne.s32.totalorder %s43, %s45
      %p49 = scmp.eq.s32.totalorder %s14, 0
      %p50 = por %p48, %p49
      %p51 = scmp.ne.s32.totalorder %s43, %s45
      %p52 = scmp.eq.s32.totalorder %s19, 1
      %p53 = por %p51, %p52
      %p54 = scmp.ne.s32.totalorder %s45, %s46
      %p55 = scmp.eq.s32.totalorder %s19, 0
      %p56 = por %p54, %p55
      %p57 = scmp.ne.s32.totalorder %s45, %s46
      %p58 = scmp.eq.s32.totalorder %s20, 1
      %p59 = por %p57, %p58
      %p61 = scmp.ne.s32.totalorder %s46, %s60
      %p62 = scmp.eq.s32.totalorder %s20, 0
      %p63 = por %p61, %p62
      %s64 = ssub.s32 %s14, %s21
      %p65 = scmp.eq.s32.totalorder %s64, 0
      %s67 = sadd.s32 %s66, 1
      %s68 = scalar_select %p65, %s66, %s67
      %p71 = pneg %p65
      %p72 = scmp.eq.s32.totalorder %s14, 1
      %p73 = por %p71, %p72
      %p74 = scmp.ne.s32.totalorder %s66, %s69
      %p75 = scmp.eq.s32.totalorder %s14, 0
      %p76 = por %p74, %p75
      %p77 = scmp.ne.s32.totalorder %s66, %s69
      %p78 = scmp.eq.s32.totalorder %s19, 1
      %p79 = por %p77, %p78
      %p80 = scmp.ne.s32.totalorder %s69, %s70
      %p81 = scmp.eq.s32.totalorder %s19, 0
      %p82 = por %p80, %p81
      %p83 = scmp.ne.s32.totalorder %s69, %s70
      %p84 = scmp.eq.s32.totalorder %s20, 1
      %p85 = por %p83, %p84
      %p87 = scmp.ne.s32.totalorder %s70, %s86
      %p88 = scmp.eq.s32.totalorder %s20, 0
      %p89 = por %p87, %p88
      %s90 = ssub.s32 %s14, %s21
      %p91 = scmp.eq.s32.totalorder %s90, 0
      %s93 = sadd.s32 %s92, 1
      %s94 = scalar_select %p91, %s92, %s93
      %p97 = pneg %p91
      %p98 = scmp.eq.s32.totalorder %s14, 1
      %p99 = por %p97, %p98
      %p100 = scmp.ne.s32.totalorder %s92, %s95
      %p101 = scmp.eq.s32.totalorder %s14, 0
      %p102 = por %p100, %p101
      %p103 = scmp.ne.s32.totalorder %s92, %s95
      %p104 = scmp.eq.s32.totalorder %s19, 1
      %p105 = por %p103, %p104
      %p106 = scmp.ne.s32.totalorder %s95, %s96
      %p107 = scmp.eq.s32.totalorder %s19, 0
      %p108 = por %p106, %p107
      %p109 = scmp.ne.s32.totalorder %s95, %s96
      %p110 = scmp.eq.s32.totalorder %s20, 1
      %p111 = por %p109, %p110
      %p113 = scmp.ne.s32.totalorder %s96, %s112
      %p114 = scmp.eq.s32.totalorder %s20, 0
      %p115 = por %p113, %p114
      %s116 = ssub.s32 %s14, %s21
      %p117 = scmp.eq.s32.totalorder %s116, 0
      %s119 = sadd.s32 %s118, 1
      %s120 = scalar_select %p117, %s118, %s119
      %p123 = pneg %p117
      %p124 = scmp.eq.s32.totalorder %s14, 1
      %p125 = por %p123, %p124
      %p126 = scmp.ne.s32.totalorder %s118, %s121
      %p127 = scmp.eq.s32.totalorder %s14, 0
      %p128 = por %p126, %p127
      %p129 = scmp.ne.s32.totalorder %s118, %s121
      %p130 = scmp.eq.s32.totalorder %s19, 1
      %p131 = por %p129, %p130
      %p132 = scmp.ne.s32.totalorder %s121, %s122
      %p133 = scmp.eq.s32.totalorder %s19, 0
      %p134 = por %p132, %p133
      %p135 = scmp.ne.s32.totalorder %s121, %s122
      %p136 = scmp.eq.s32.totalorder %s20, 1
      %p137 = por %p135, %p136
      %p139 = scmp.ne.s32.totalorder %s122, %s138
      %p140 = scmp.eq.s32.totalorder %s20, 0
      %p141 = por %p139, %p140
      %p142 = scmp.le.s32.totalorder 1, %s14
      %p143 = scmp.lt.s32.totalorder %s14, 3
      %p144 = pnand %p142, %p143
      %p145 = pneg %p144
      // Predicated region
      $region9: #{tpu_custom_call.1} parent=5 // pred_check
        _
      $region10: #{tpu_custom_call.1} parent=5 // pred_check_branch
        %147 = sbr.rel (%p144) target = $region12
      $region11: #{tpu_custom_call.1} parent=5 // pred_region
        %s148 = ssub.s32 %s14, 1
        // Predicated region
        $region13: #{tpu_custom_call.1} parent=11 // pred_check
          %p149 = pneg %p35
        $region14: #{tpu_custom_call.1} parent=11 // pred_check_branch
          %151 = sbr.rel (%p149) target = $region16
        $region15: #{tpu_custom_call.1} parent=11 // pred_region
          %s153 = ssub.s32 256, 256
          %154 = vsyncadd [#allocation3], %s153
          %s155 = sshll.u32 [#allocation2], 4
          %s156 = int_to_ptr.vmem [resolvable:$true] %s155
          %161 = dma.hbm_to_vmem [thread:$0]  %s0, 256, %s156, [#allocation3], 128, 128, 8
        $region16: #{tpu_custom_call.1} parent=11 // pred_fallthru
          _
        // Predicated region
        $region17: #{tpu_custom_call.1} parent=11 // pred_check
          %p162 = pneg %p56
        $region18: #{tpu_custom_call.1} parent=11 // pred_check_branch
          %164 = sbr.rel (%p162) target = $region20
        $region19: #{tpu_custom_call.1} parent=11 // pred_region
          _
        $region20: #{tpu_custom_call.1} parent=11 // pred_fallthru
          _
      $region12: #{tpu_custom_call.1} parent=5 // pred_fallthru
        _
      %p165 = scmp.lt.s32.totalorder %s14, 2
      // Predicated region
      $region21: #{tpu_custom_call.1} parent=5 // pred_check
        %p166 = pneg %p165
      $region22: #{tpu_custom_call.1} parent=5 // pred_check_branch
        %168 = sbr.rel (%p166) target = $region24
      $region23: #{tpu_custom_call.1} parent=5 // pred_region
        // Predicated region
        $region25: #{tpu_custom_call.1} parent=23 // pred_check
          %p169 = pneg %p76
        $region26: #{tpu_custom_call.1} parent=23 // pred_check_branch
          %171 = sbr.rel (%p169) target = $region28
        $region27: #{tpu_custom_call.1} parent=23 // pred_region
          %s172 = smul.u32 2, %s14
          %p173 = scmp.lt.s32.totalorder %s172, 3
          %s174 = scalar_select %p173, %s172, 3
          %s175 = smul.addr %s174, 8
          %s176 = scalar_lea.vmem %s2, %s175
          %s177 = smul.u32 2, %s14
        $region28: #{tpu_custom_call.1} parent=23 // pred_fallthru
          _
        // Predicated region
        $region29: #{tpu_custom_call.1} parent=23 // pred_check
          %p178 = pneg %p102
        $region30: #{tpu_custom_call.1} parent=23 // pred_check_branch
          %180 = sbr.rel (%p178) target = $region32
        $region31: #{tpu_custom_call.1} parent=23 // pred_region
          %s181 = smul.u32 2, %s14
          %p182 = scmp.lt.s32.totalorder %s181, 3
          %s183 = scalar_select %p182, %s181, 3
          %s184 = smul.addr %s183, 8
          %s185 = scalar_lea.vmem %s3, %s184
          %s186 = smul.u32 2, %s14
        $region32: #{tpu_custom_call.1} parent=23 // pred_fallthru
          _
      $region24: #{tpu_custom_call.1} parent=5 // pred_fallthru
        _
      %p187 = scmp.le.s32.totalorder 1, %s14
      %p188 = scmp.lt.s32.totalorder %s14, 3
      %p189 = pnand %p187, %p188
      %p190 = pneg %p189
      // Predicated region
      $region33: #{tpu_custom_call.1} parent=5 // pred_check
        _
      $region34: #{tpu_custom_call.1} parent=5 // pred_check_branch
        %192 = sbr.rel (%p189) target = $region36
      $region35: #{tpu_custom_call.1} parent=5 // pred_region
        %s193 = ssub.s32 %s14, 1
        // Predicated region
        $region37: #{tpu_custom_call.1} parent=35 // pred_check
          %p194 = pneg %p35
        $region38: #{tpu_custom_call.1} parent=35 // pred_check_branch
          %196 = sbr.rel (%p194) target = $region40
        $region39: #{tpu_custom_call.1} parent=35 // pred_region
          %197 = dma.done [#allocation3], 256
        $region40: #{tpu_custom_call.1} parent=35 // pred_fallthru
          _
        %p198 = pneg %p35
        %p199 = pneg %p32
        %p200 = pneg %p56
        %p201 = pneg %p53
        %s202 = smul.u32 2, %s19
        %p203 = scmp.lt.s32.totalorder %s202, 3
        %s204 = scalar_select %p203, %s202, 3
        %s205 = smul.addr %s204, 8
        %s206 = scalar_lea.vmem %s2, %s205
        %p207 = pneg %p82
        %p208 = pneg %p79
        %s209 = smul.u32 2, %s19
        %p210 = scmp.lt.s32.totalorder %s209, 3
        %s211 = scalar_select %p210, %s209, 3
        %s212 = smul.addr %s211, 8
        %s213 = scalar_lea.vmem %s3, %s212
        %p214 = pneg %p108
        %p215 = pneg %p105
        %p216 = pneg %p134
        %p217 = pneg %p131
        %s218 = sand.u32 %s121, 1
        %s219 = scalar_lea.sflag [#allocation4], %s218
        %s220 = sand.u32 %s121, 1
        %s221 = smul.addr %s220, 8
        %s222 = scalar_lea.vmem [#allocation5], %s221
        %s223 = smul.u32 2, %s19
        %p224 = scmp.lt.s32.totalorder %s223, 3
        %s225 = scalar_select %p224, %s223, 3
        %s226 = smul.addr %s225, 8
        %s227 = scalar_lea.vmem %s2, %s226
        %s228 = smul.u32 2, %s19
        %s229 = smul.u32 2, %s19
        %p230 = scmp.lt.s32.totalorder %s229, 3
        %s231 = scalar_select %p230, %s229, 3
        %s232 = smul.addr %s231, 8
        %s233 = scalar_lea.vmem %s3, %s232
        %s234 = smul.u32 2, %s19
        %v235 = vld [vmem:[#allocation2] sm:$0xff]
        %v236 = vld [vmem:[#allocation2 + $0x8] sm:$0xff]
        %v237 = vld [vmem:[%s1] sm:$0xff]
        %v238 = vld [vmem:[%s1 + $0x8] sm:$0xff]
        %v239 = vld [vmem:[%s1 + $0x10] sm:$0xff]
        %v240 = vld [vmem:[%s1 + $0x18] sm:$0xff]
        %v241 = vld [vmem:[%s1 + $0x20] sm:$0xff]
        %v242 = vld [vmem:[%s1 + $0x28] sm:$0xff]
        %v243 = vld [vmem:[%s1 + $0x30] sm:$0xff]
        %v244 = vld [vmem:[%s1 + $0x38] sm:$0xff]
        %v245 = vld [vmem:[%s1 + $0x40] sm:$0xff]
        %v246 = vld [vmem:[%s1 + $0x48] sm:$0xff]
        %v247 = vld [vmem:[%s227] sm:$0xff]
        %v248 = vld [vmem:[%s227 + $0x8] sm:$0xff]
        %v249 = vld [vmem:[%s233] sm:$0xff]
        %v250 = vld [vmem:[%s233 + $0x8] sm:$0xff]
        %v251 = vmul.f32 %v247, %v247
        %v252 = vmul.f32 %v248, %v248
        %v253 = vmul.f32 %v249, %v249
        %v254 = vmul.f32 %v250, %v250
        %v255 = vmul.f32 %v247, %v249
        %v256 = vmul.f32 %v248, %v250
        %259 = vrot.lane.b32.xlu0 %v249, 16
        %v260 = vpop.permute.xlu0 %259
        %261 = vrot.lane.b32.xlu0 %v250, 16
        %v262 = vpop.permute.xlu0 %261
        %267 = vrot.lane.b32.xlu0 %v251, 32
        %v268 = vpop.permute.xlu0 %267
        %269 = vrot.lane.b32.xlu0 %v252, 32
        %v270 = vpop.permute.xlu0 %269
        %275 = vrot.lane.b32.xlu0 %v253, 48
        %v276 = vpop.permute.xlu0 %275
        %277 = vrot.lane.b32.xlu0 %v254, 48
        %v278 = vpop.permute.xlu0 %277
        %283 = vrot.lane.b32.xlu0 %v255, 64
        %v284 = vpop.permute.xlu0 %283
        %285 = vrot.lane.b32.xlu0 %v256, 64
        %v286 = vpop.permute.xlu0 %285
        %vm289 = vcmask 130048
        %v290 = vsel %vm289, %v247, %v260
        %v291 = vsel %vm289, %v248, %v262
        %vm292 = vcmask 261120
        %v293 = vsel %vm292, %v290, %v268
        %v294 = vsel %vm292, %v291, %v270
        %vm295 = vcmask 392192
        %v296 = vsel %vm295, %v293, %v276
        %v297 = vsel %vm295, %v294, %v278
        %vm298 = vcmask 523264
        %v299 = vsel %vm298, %v296, %v284
        %v300 = vsel %vm298, %v297, %v286
        %v302 = vsel %vm289, %v235, 0
        %v305 = vsel %vm289, %v236, 0
        %307 = vmatprep.subr.mxu0 0.0
        %308 = vmatpush1.msra.mxu0 %v299
        %309 = vmatprep.subr.mxu0 0.0
        %310 = vmatpush1.msra.mxu0 %v300
        %311 = vmatprep.subr.mxu0 0.0
        %312 = vmatpush1.msra.mxu0 0.0
        %313 = vmatprep.subr.mxu0 0.0
        %314 = vmatpush1.msra.mxu0 0.0
        %315 = vmatprep.subr.mxu0 0.0
        %316 = vmatpush1.msra.mxu0 0.0
        %317 = vmatprep.subr.mxu0 0.0
        %318 = vmatpush1.msra.mxu0 0.0
        %319 = vmatprep.subr.mxu0 0.0
        %320 = vmatpush1.msra.mxu0 0.0
        %321 = vmatprep.subr.mxu0 0.0
        %322 = vmatpush1.msra.mxu0 0.0
        %323 = vmatprep.subr.mxu0 0.0
        %324 = vmatpush1.msra.mxu0 0.0
        %325 = vmatprep.subr.mxu0 0.0
        %326 = vmatpush1.msra.mxu0 0.0
        %327 = vmatprep.subr.mxu0 0.0
        %328 = vmatpush1.msra.mxu0 0.0
        %329 = vmatprep.subr.mxu0 0.0
        %330 = vmatpush1.msra.mxu0 0.0
        %331 = vmatprep.subr.mxu0 0.0
        %332 = vmatpush1.msra.mxu0 0.0
        %333 = vmatprep.subr.mxu0 0.0
        %334 = vmatpush1.msra.mxu0 0.0
        %335 = vmatprep.subr.mxu0 0.0
        %336 = vmatpush1.msra.mxu0 0.0
        %337 = vmatprep.subr.mxu0 0.0
        %338 = vmatpush1.msra.mxu0 0.0
        %339 = vmatprep.subr.mxu0 0.0
        %340 = vmatpush1.msra.mxu0 0.0
        %341 = vmatprep.subr.mxu0 0.0
        %342 = vmatpush1.msra.mxu0 0.0
        %343 = vmatprep.subr.mxu0 0.0
        %344 = vmatpush1.msra.mxu0 0.0
        %345 = vmatprep.subr.mxu0 0.0
        %346 = vmatpush1.msra.mxu0 0.0
        %347 = vmatprep.subr.mxu0 0.0
        %348 = vmatpush1.msra.mxu0 0.0
        %349 = vmatprep.subr.mxu0 0.0
        %350 = vmatpush1.msra.mxu0 0.0
        %351 = vmatprep.subr.mxu0 0.0
        %352 = vmatpush1.msra.mxu0 0.0
        %353 = vmatprep.subr.mxu0 0.0
        %354 = vmatpush1.msra.mxu0 0.0
        %355 = vmatprep.subr.mxu0 0.0
        %356 = vmatpush1.msra.mxu0 0.0
        %357 = vmatprep.subr.mxu0 0.0
        %358 = vmatpush1.msra.mxu0 0.0
        %359 = vmatprep.subr.mxu0 0.0
        %360 = vmatpush1.msra.mxu0 0.0
        %361 = vmatprep.subr.mxu0 0.0
        %362 = vmatpush1.msra.mxu0 0.0
        %363 = vmatprep.subr.mxu0 0.0
        %364 = vmatpush1.msra.mxu0 0.0
        %365 = vmatprep.subr.mxu0 0.0
        %366 = vmatpush1.msra.mxu0 0.0
        %367 = vmatprep.subr.mxu0 0.0
        %368 = vmatpush1.msra.mxu0 0.0
        %369 = vmatprep.subr.mxu0 0.0
        %370 = vmatpush1.msra.mxu0 0.0
        %371 = vmatprep.mubr.f32.mxu0 0.0
        %372 = vmatmul.mubr.f32.gmra.mrb[0].mxu0 %v302
        %v373 = vpop.f32.mrb[0].mxu0
        %v374 = vadd.f32 0.0, %v373
        %v375 = vpop.f32.mrb[0].mxu0
        %376 = vmatprep.mubr.f32.mxu0 0.0
        %377 = vmatmul.mubr.f32.gmra.mrb[0].mxu0 %v305
        %v378 = vpop.f32.mrb[0].mxu0
        %v379 = vadd.f32 0.0, %v378
        %v380 = vpop.f32.mrb[0].mxu0
        %381 = vdwg.mxu0
        %vm382 = vcmask 654336
        %v384 = vsel %vm382, %v374, 0
        %v387 = vsel %vm382, %v379, 0
        %389 = vmatprep.subr.mxu0 0.0
        %390 = vmatpush1.msra.mxu0 %v237
        %391 = vmatprep.subr.mxu0 0.0
        %392 = vmatpush1.msra.mxu0 %v238
        %393 = vmatprep.subr.mxu0 0.0
        %394 = vmatpush1.msra.mxu0 %v239
        %395 = vmatprep.subr.mxu0 0.0
        %396 = vmatpush1.msra.mxu0 %v240
        %397 = vmatprep.subr.mxu0 0.0
        %398 = vmatpush1.msra.mxu0 %v241
        %399 = vmatprep.subr.mxu0 0.0
        %400 = vmatpush1.msra.mxu0 %v242
        %401 = vmatprep.subr.mxu0 0.0
        %402 = vmatpush1.msra.mxu0 %v243
        %403 = vmatprep.subr.mxu0 0.0
        %404 = vmatpush1.msra.mxu0 %v244
        %405 = vmatprep.subr.mxu0 0.0
        %406 = vmatpush1.msra.mxu0 %v245
        %407 = vmatprep.subr.mxu0 0.0
        %408 = vmatpush1.msra.mxu0 %v246
        %409 = vmatprep.subr.mxu0 0.0
        %410 = vmatpush1.msra.mxu0 0.0
        %411 = vmatprep.subr.mxu0 0.0
        %412 = vmatpush1.msra.mxu0 0.0
        %413 = vmatprep.subr.mxu0 0.0
        %414 = vmatpush1.msra.mxu0 0.0
        %415 = vmatprep.subr.mxu0 0.0
        %416 = vmatpush1.msra.mxu0 0.0
        %417 = vmatprep.subr.mxu0 0.0
        %418 = vmatpush1.msra.mxu0 0.0
        %419 = vmatprep.subr.mxu0 0.0
        %420 = vmatpush1.msra.mxu0 0.0
        %421 = vmatprep.subr.mxu0 0.0
        %422 = vmatpush1.msra.mxu0 0.0
        %423 = vmatprep.subr.mxu0 0.0
        %424 = vmatpush1.msra.mxu0 0.0
        %425 = vmatprep.subr.mxu0 0.0
        %426 = vmatpush1.msra.mxu0 0.0
        %427 = vmatprep.subr.mxu0 0.0
        %428 = vmatpush1.msra.mxu0 0.0
        %429 = vmatprep.subr.mxu0 0.0
        %430 = vmatpush1.msra.mxu0 0.0
        %431 = vmatprep.subr.mxu0 0.0
        %432 = vmatpush1.msra.mxu0 0.0
        %433 = vmatprep.subr.mxu0 0.0
        %434 = vmatpush1.msra.mxu0 0.0
        %435 = vmatprep.subr.mxu0 0.0
        %436 = vmatpush1.msra.mxu0 0.0
        %437 = vmatprep.subr.mxu0 0.0
        %438 = vmatpush1.msra.mxu0 0.0
        %439 = vmatprep.subr.mxu0 0.0
        %440 = vmatpush1.msra.mxu0 0.0
        %441 = vmatprep.subr.mxu0 0.0
        %442 = vmatpush1.msra.mxu0 0.0
        %443 = vmatprep.subr.mxu0 0.0
        %444 = vmatpush1.msra.mxu0 0.0
        %445 = vmatprep.subr.mxu0 0.0
        %446 = vmatpush1.msra.mxu0 0.0
        %447 = vmatprep.subr.mxu0 0.0
        %448 = vmatpush1.msra.mxu0 0.0
        %449 = vmatprep.subr.mxu0 0.0
        %450 = vmatpush1.msra.mxu0 0.0
        %451 = vmatprep.subr.mxu0 0.0
        %452 = vmatpush1.msra.mxu0 0.0
        %453 = vmatprep.mubr.f32.mxu0 0.0
        %454 = vmatmul.mubr.f32.gmra.mrb[0].mxu0 %v384
        %v455 = vpop.f32.mrb[0].mxu0
        %v456 = vadd.f32 0.0, %v455
        %v457 = vpop.f32.mrb[0].mxu0
        %458 = vmatprep.mubr.f32.mxu0 0.0
        %459 = vmatmul.mubr.f32.gmra.mrb[0].mxu0 %v387
        %v460 = vpop.f32.mrb[0].mxu0
        %v461 = vadd.f32 0.0, %v460
        %v462 = vpop.f32.mrb[0].mxu0
        %463 = vdwg.mxu0
        %466 = vrot.lane.b32.xlu0 %v456, 112
        %v467 = vpop.permute.xlu0 %466
        %468 = vrot.lane.b32.xlu0 %v461, 112
        %v469 = vpop.permute.xlu0 %468
        %v472 = vmul.f32 %v456, %v467
        %v473 = vmul.f32 %v461, %v469
        %v474 = vmul.f32 %v472, 0.012345679
        %v475 = vmul.f32 %v473, 0.012345679
        %478 = vrot.lane.b32.xlu0 %v474, 64
        %v479 = vpop.permute.xlu0 %478
        %480 = vrot.lane.b32.xlu0 %v475, 64
        %v481 = vpop.permute.xlu0 %480
        %v484 = vsub.f32 %v456, %v479
        %v485 = vsub.f32 %v461, %v481
        %v486 = vmul.f32 %v456, %v456
        %v487 = vmul.f32 %v461, %v461
        %v488 = vmul.f32 %v486, 0.012345679
        %v489 = vmul.f32 %v487, 0.012345679
        %492 = vrot.lane.b32.xlu0 %v488, 32
        %v493 = vpop.permute.xlu0 %492
        %494 = vrot.lane.b32.xlu0 %v489, 32
        %v495 = vpop.permute.xlu0 %494
        %v498 = vsub.f32 %v456, %v493
        %v499 = vsub.f32 %v461, %v495
        %v500 = vmax.f32 %v498, 0.0
        %v501 = vmax.f32 %v499, 0.0
        %v502 = vmul.f32 %v484, %v484
        %v503 = vmul.f32 %v485, %v485
        %506 = vrot.lane.b32.xlu0 %v500, 112
        %v507 = vpop.permute.xlu0 %506
        %508 = vrot.lane.b32.xlu0 %v501, 112
        %v509 = vpop.permute.xlu0 %508
        %v512 = vmul.f32 %v500, %v507
        %v513 = vmul.f32 %v501, %v509
        %v514 = vadd.f32 %v512, 1e-05
        %v515 = vadd.f32 %v513, 1e-05
        %v516 = vrcp.pop %v514
        %v517 = vrcp.pop %v515
        %520 = vrot.lane.b32.xlu0 %v516, 32
        %v521 = vpop.permute.xlu0 %520
        %522 = vrot.lane.b32.xlu0 %v517, 32
        %v523 = vpop.permute.xlu0 %522
        %v526 = vmul.f32 %v502, %v521
        %v527 = vmul.f32 %v503, %v523
        %530 = vrot.lane.b32.xlu0 %v526, 64
        %v531 = vpop.permute.xlu0 %530
        %532 = vrot.lane.b32.xlu0 %v527, 64
        %v533 = vpop.permute.xlu0 %532
        %v536 = vsel %vm289, %v531, 0.0
        %v537 = vsel %vm289, %v533, 0.0
        %v538 = vadd.f32 %v536, %v537
        %539 = vadd.xlane.f32.xlu0 %v538
        %v540 = vpop.xlane.xlu0 %539
        %v541 = vrot.slane %v540, 4
        %v542 = vadd.f32 %v540, %v541
        %v543 = vrot.slane %v542, 2
        %v544 = vadd.f32 %v542, %v543
        %v545 = vrot.slane %v544, 1
        %v546 = vadd.f32 %v544, %v545
        %s547 = vtos %v546
        %v548 = vstv %s547
        %549 = vst [vmem:[%s222] sm:$0xff] %v548
        %s550 = sand.u32 %s121, 1
        %s551 = scalar_lea.sflag [#allocation4], %s550
        %s552 = sand.u32 %s121, 1
        %s553 = smul.addr %s552, 8
        %s554 = scalar_lea.vmem [#allocation5], %s553
        // Predicated region
        $region41: #{tpu_custom_call.1} parent=35 // pred_check
          %p555 = pneg %p131
        $region42: #{tpu_custom_call.1} parent=35 // pred_check_branch
          %557 = sbr.rel (%p555) target = $region44
        $region43: #{tpu_custom_call.1} parent=35 // pred_region
          %s559 = ssub.s32 128, 128
          %560 = vsyncadd %s551, %s559
          %s561 = smul.addr %s19, 128
          %s562 = scalar_lea.hbm %s4, %s561
          %s564 = sshll.u32 %s554, 4
          %s565 = int_to_ptr.vmem [resolvable:$true] %s564
          %567 = dma.vmem_to_hbm [thread:$0]  %s565, 128, %s562, %s551
        $region44: #{tpu_custom_call.1} parent=35 // pred_fallthru
          _
      $region36: #{tpu_custom_call.1} parent=5 // pred_fallthru
        _
      %p568 = scmp.le.s32.totalorder 2, %s14
      // Predicated region
      $region45: #{tpu_custom_call.1} parent=5 // pred_check
        %p569 = pneg %p568
      $region46: #{tpu_custom_call.1} parent=5 // pred_check_branch
        %571 = sbr.rel (%p569) target = $region48
      $region47: #{tpu_custom_call.1} parent=5 // pred_region
        %s572 = ssub.s32 %s14, 2
        // Predicated region
        $region49: #{tpu_custom_call.1} parent=47 // pred_check
          %p573 = pneg %p137
        $region50: #{tpu_custom_call.1} parent=47 // pred_check_branch
          %575 = sbr.rel (%p573) target = $region52
        $region51: #{tpu_custom_call.1} parent=47 // pred_region
          %s576 = sand.u32 %s122, 1
          %s577 = scalar_lea.sflag [#allocation4], %s576
          %s578 = sand.u32 %s122, 1
          %s579 = smul.addr %s578, 8
          %s580 = scalar_lea.vmem [#allocation5], %s579
          %581 = dma.done %s577, 128
        $region52: #{tpu_custom_call.1} parent=47 // pred_fallthru
          _
      $region48: #{tpu_custom_call.1} parent=5 // pred_fallthru
        _
    $region6: #{tpu_custom_call.1} parent=1 // loop_footer
      %s18 = sadd.s32 1, %s14
    $region7: #{tpu_custom_call.1} parent=1 // loop_footer_branch
      %13 = sbr.rel target = $region3
    $region8: #{tpu_custom_call.1} parent=1 // loop_exit
      _
    %582 = vsyncpa [#allocation3], 1
    %s583 = scalar_lea.sflag [#allocation3], 1
    %584 = vsyncpa %s583, 1
    %585 = vsyncpa [#allocation4], 1
    %s586 = scalar_lea.sflag [#allocation4], 1
    %587 = vsyncpa %s586, 1

</llo_original>
